<compile_context>
chip_gen: v5e
topology: v5e:2x2
jax: 0.10.0
libtpu: 0.0.40
codegen_flags: <defaults>
</compile_context>

<pallas_src>
import functools

import jax
import jax.numpy as jnp
from jax.experimental import pallas as pl
from jax.experimental.pallas import tpu as pltpu


def _upsample_matmul_kernel(x_ref, r_ref, o_ref):
    """One block of rows: (TR, W) @ (W, s*s*W) -> (TR, s*s*W)."""
    o_ref[...] = jnp.dot(
        x_ref[...], r_ref[...], preferred_element_type=jnp.float32
    ).astype(o_ref.dtype)


def _replication_matrix(w: int, s: int, dtype) -> jax.Array:
    """Static 0/1 matrix R (w, s*s*w) with R[w0, r*w*s + w0*s + q] = 1."""
    cols = jnp.arange(s * s * w)
    src = (cols % (w * s)) // s          # input column feeding each output column
    rows = jnp.arange(w)
    return (rows[:, None] == src[None, :]).astype(dtype)


def _pick_tile_rows(total_rows: int, w_in: int, w_out: int, itemsize: int) -> int:
    """Choose block rows: big (toward HBM roofline) but VMEM-safe, multiple of 8,
    and keeping >= 2 grid steps so v7x's two TensorCores both get work."""
    lane, sub = 128, 8
    w_in_p = ((w_in + lane - 1) // lane) * lane      # lane padding in VMEM
    w_out_p = ((w_out + lane - 1) // lane) * lane
    budget = 8 * 1024 * 1024                          # per-step, double-buffered
    tr = budget // (2 * (w_in_p + w_out_p) * itemsize)
    tr = max(sub, (tr // sub) * sub)
    if total_rows <= sub:
        return total_rows                             # full-dim block (always legal)
    if tr >= total_rows:
        half = (total_rows + 1) // 2
        tr = ((half + sub - 1) // sub) * sub          # ~2 grid steps
        tr = min(tr, total_rows)
    return tr


def upsample_simple(x: jax.Array, stride: int) -> jax.Array:
    """Nearest-neighbor upsample of an NCHW tensor by integer `stride`."""
    B, C, H, W = x.shape
    s = int(stride)
    if s == 1:
        return x

    rows = B * C * H
    w_out = s * s * W
    itemsize = jnp.dtype(x.dtype).itemsize

    x2 = x.reshape(rows, W)                           # contiguous view
    rep = _replication_matrix(W, s, x.dtype)
    tr = _pick_tile_rows(rows, W, w_out, itemsize)
    grid = (pl.cdiv(rows, tr),)

    out2 = pl.pallas_call(
        _upsample_matmul_kernel,
        out_shape=jax.ShapeDtypeStruct((rows, w_out), x.dtype),
        grid_spec=pl.GridSpec(
            grid=grid,
            in_specs=[
                pl.BlockSpec((tr, W), lambda i: (i, 0)),
                pl.BlockSpec((W, w_out), lambda i: (0, 0)),   # resident, tiny
            ],
            out_specs=pl.BlockSpec((tr, w_out), lambda i: (i, 0)),
        ),
        compiler_params=pltpu.CompilerParams(
            dimension_semantics=("parallel",),
            vmem_limit_bytes=32 * 1024 * 1024,
        ),
        cost_estimate=pl.CostEstimate(
            flops=0,
            transcendentals=0,
            bytes_accessed=rows * W * (1 + s * s) * itemsize,
        ),
    )(x2, rep)

    return out2.reshape(B, C, H * s, W * s)           # contiguous view


def upsample_ref(x: jax.Array, stride: int) -> jax.Array:
    """Pure-JAX reference (matches torch.nn.Upsample(mode='nearest'))."""
    x = jnp.repeat(x, stride, axis=2)
    x = jnp.repeat(x, stride, axis=3)
    return x


if __name__ == "__main__":
    # Module signature: UpsampleSimple(in_channels, out_channels, kernel_size, stride)
    # Only `stride` affects the forward pass (the upsample scale factor).
    in_channels, out_channels, kernel_size, stride = 4, 4, 3, 2

    key = jax.random.PRNGKey(0)
    x = jax.random.normal(key, (2, in_channels, 16, 16), dtype=jnp.float32)

    fn = jax.jit(functools.partial(upsample_simple, stride=stride))
    out = jax.block_until_ready(fn(x))

    ref = upsample_ref(x, stride)
    assert out.shape == (2, in_channels, 16 * stride, 16 * stride), out.shape
    assert out.dtype == x.dtype
    assert jnp.array_equal(out, ref), "Pallas output mismatch vs reference"

    print("KERNEL_OK")
</pallas_src>

<mosaic_0001>
module attributes {stable_mosaic.version = 11 : i64} {
  func.func @_upsample_matmul_kernel(%arg0: i32, %arg1: memref<64x16xf32, #tpu.memory_space<vmem>>, %arg2: memref<16x64xf32, #tpu.memory_space<vmem>>, %arg3: memref<64x64xf32, #tpu.memory_space<vmem>>) attributes {dimension_semantics = [#tpu.dimension_semantics<parallel>], iteration_bounds = array<i64: 2>, scalar_prefetch = 0 : i64, scratch_operands = 0 : i64, tpu.core_type = #tpu.core_type<tc>, window_params = [{transform_indices = @transform_0, window_bounds = array<i64: 64, 16>}, {pipeline_mode = #tpu.pipeline_mode<synchronous>, transform_indices = @transform_1, window_bounds = array<i64: 16, 64>}, {transform_indices = @transform_2, window_bounds = array<i64: 64, 64>}]} {
    %c0 = arith.constant 0 : index
    %c0_0 = arith.constant 0 : index
    %0 = vector.load %arg1[%c0, %c0_0] : memref<64x16xf32, #tpu.memory_space<vmem>>, vector<64x16xf32>
    %c0_1 = arith.constant 0 : index
    %c0_2 = arith.constant 0 : index
    %1 = vector.load %arg2[%c0_1, %c0_2] : memref<16x64xf32, #tpu.memory_space<vmem>>, vector<16x64xf32>
    %cst = arith.constant dense<0.000000e+00> : vector<64x64xf32>
    %2 = tpu.matmul %0, %1, %cst {dimension_numbers = #tpu.dot_dimension_numbers<[1], [0], [0], [1], [0, 0, 1, 1], [], []>} : vector<64x16xf32>, vector<16x64xf32>, vector<64x64xf32> -> vector<64x64xf32>
    %c0_3 = arith.constant 0 : index
    %c0_4 = arith.constant 0 : index
    %3 = vector.load %arg3[%c0_3, %c0_4] : memref<64x64xf32, #tpu.memory_space<vmem>>, vector<64x64xf32>
    tpu.vector_store %arg3[%c0_3, %c0_4], %2 {strides = array<i32>} : memref<64x64xf32, #tpu.memory_space<vmem>>, vector<64x64xf32>,
    return
  }
  func.func @transform_0(%arg0: i32) -> (i32, i32) {
    %c0_i32 = arith.constant 0 : i32
    %c0_i32_0 = arith.constant 0 : i32
    return %arg0, %c0_i32 : i32, i32
  }
  func.func @transform_1(%arg0: i32) -> (i32, i32) {
    %c0_i32 = arith.constant 0 : i32
    %c0_i32_0 = arith.constant 0 : i32
    %c0_i32_1 = arith.constant 0 : i32
    return %c0_i32, %c0_i32_0 : i32, i32
  }
  func.func @transform_2(%arg0: i32) -> (i32, i32) {
    %c0_i32 = arith.constant 0 : i32
    %c0_i32_0 = arith.constant 0 : i32
    return %arg0, %c0_i32 : i32, i32
  }
}

</mosaic_0001>

<llo_original>
// kernel: upsample_simple.1
$region0: #{upsample_simple.1}
  #allocation0 [shape = 'u32[]', space=smem, size = 0x4, offset = 0x4, fixed_abs, tag = 'smem constant byte address 0x4 - core index']
  #allocation1 [shape = 'u32[72,128]{1,0:T(1,128)}', space=vmem, size = 0x9000, scoped, tag = 'internal scratch']
  %s0 = inlined_call_operand.hbm [shape: f32[128,16], index: 0, kind: input, shape index: {}]
  %s1 = inlined_call_operand.vmem [shape: f32[16,64], index: 1, kind: input, shape index: {}]
  %s2 = inlined_call_operand.vmem [shape: f32[128,64], index: 2, kind: output, shape index: {}]
  %s3 = sld [smem:[#allocation0]]
  $region45: #{upsample_simple.1} parent=0
    _
  %s5 = ssub.s32 1, %s3
  %s6 = scalar_select 0, %s5, %s3
  $region1: #{upsample_simple.1} parent=0
    #allocation2 [shape = 'u8[65536]{0}', space=vmem, size = 0x10000, scoped, tag = 'input window, operand 0']
    #allocation3 [shape = 's32[2]{0}', space=sflag, size = 0x8, scoped, tag = 'scoped memory for upsample_simple.1']
    %7 = vsyncpa [#allocation3], 0
    %s8 = scalar_lea.sflag [#allocation3], 1
    %9 = vsyncpa %s8, 0
    loop: start=0, step=1, limit=4
    $region2: #{upsample_simple.1} parent=1 // loop_pre_header
      _
    $region3: #{upsample_simple.1} parent=1 // loop_header
      %s11 = sphi 0, %s15
      %p12 = scmp.ge.s32.totalorder %s11, 4
      %s21 = sphi 0, %s23
      %s24 = sphi 0, %s21
      %s25 = sphi 0, %s24
      %s41 = sphi 0, %s25
      %s45 = sphi 0, %s45
      %s47 = sphi 0, %s45
      %s48 = sphi 0, %s47
      %s62 = sphi 0, %s48
      %s68 = sphi 0, %s70
      %s71 = sphi 0, %s68
      %s72 = sphi 0, %s71
      %s88 = sphi 0, %s72
    $region4: #{upsample_simple.1} parent=1 // loop_header_branch
      %14 = sbr.rel (%p12) target = $region8
    $region5: #{upsample_simple.1} parent=1 // loop_body
      %s16 = ssub.s32 %s11, 1
      %s17 = ssub.s32 %s11, 2
      %s18 = sadd.s32 %s11, 1
      %s19 = ssub.s32 %s11, %s18
      %p20 = scmp.eq.s32.totalorder %s19, 0
      %s22 = sadd.s32 %s21, 1
      %s23 = scalar_select %p20, %s21, %s22
      %p26 = pneg %p20
      %p27 = scmp.eq.s32.totalorder %s11, 1
      %p28 = por %p26, %p27
      %p29 = scmp.ne.s32.totalorder %s21, %s24
      %p30 = scmp.eq.s32.totalorder %s11, 0
      %p31 = por %p29, %p30
      %p32 = scmp.ne.s32.totalorder %s21, %s24
      %p33 = scmp.eq.s32.totalorder %s16, 1
      %p34 = por %p32, %p33
      %p35 = scmp.ne.s32.totalorder %s24, %s25
      %p36 = scmp.eq.s32.totalorder %s16, 0
      %p37 = por %p35, %p36
      %p38 = scmp.ne.s32.totalorder %s24, %s25
      %p39 = scmp.eq.s32.totalorder %s17, 1
      %p40 = por %p38, %p39
      %p42 = scmp.ne.s32.totalorder %s25, %s41
      %p43 = scmp.eq.s32.totalorder %s17, 0
      %p44 = por %p42, %p43
      %s46 = sadd.s32 %s45, 1
      %p49 = scmp.eq.s32.totalorder %s11, 1
      %p50 = scmp.ne.s32.totalorder %s45, %s47
      %p51 = scmp.eq.s32.totalorder %s11, 0
      %p52 = por %p50, %p51
      %p53 = scmp.ne.s32.totalorder %s45, %s47
      %p54 = scmp.eq.s32.totalorder %s16, 1
      %p55 = por %p53, %p54
      %p56 = scmp.ne.s32.totalorder %s47, %s48
      %p57 = scmp.eq.s32.totalorder %s16, 0
      %p58 = por %p56, %p57
      %p59 = scmp.ne.s32.totalorder %s47, %s48
      %p60 = scmp.eq.s32.totalorder %s17, 1
      %p61 = por %p59, %p60
      %p63 = scmp.ne.s32.totalorder %s48, %s62
      %p64 = scmp.eq.s32.totalorder %s17, 0
      %p65 = por %p63, %p64
      %s66 = ssub.s32 %s11, %s18
      %p67 = scmp.eq.s32.totalorder %s66, 0
      %s69 = sadd.s32 %s68, 1
      %s70 = scalar_select %p67, %s68, %s69
      %p73 = pneg %p67
      %p74 = scmp.eq.s32.totalorder %s11, 1
      %p75 = por %p73, %p74
      %p76 = scmp.ne.s32.totalorder %s68, %s71
      %p77 = scmp.eq.s32.totalorder %s11, 0
      %p78 = por %p76, %p77
      %p79 = scmp.ne.s32.totalorder %s68, %s71
      %p80 = scmp.eq.s32.totalorder %s16, 1
      %p81 = por %p79, %p80
      %p82 = scmp.ne.s32.totalorder %s71, %s72
      %p83 = scmp.eq.s32.totalorder %s16, 0
      %p84 = por %p82, %p83
      %p85 = scmp.ne.s32.totalorder %s71, %s72
      %p86 = scmp.eq.s32.totalorder %s17, 1
      %p87 = por %p85, %p86
      %p89 = scmp.ne.s32.totalorder %s72, %s88
      %p90 = scmp.eq.s32.totalorder %s17, 0
      %p91 = por %p89, %p90
      %p92 = scmp.le.s32.totalorder 1, %s11
      %p93 = scmp.lt.s32.totalorder %s11, 3
      %p94 = pnand %p92, %p93
      %p95 = pneg %p94
      // Predicated region
      $region9: #{upsample_simple.1} parent=5 // pred_check
        _
      $region10: #{upsample_simple.1} parent=5 // pred_check_branch
        %97 = sbr.rel (%p94) target = $region12
      $region11: #{upsample_simple.1} parent=5 // pred_region
        %s98 = ssub.s32 %s11, 1
        // Predicated region
        $region13: #{upsample_simple.1} parent=11 // pred_check
          %p99 = pneg %p58
        $region14: #{upsample_simple.1} parent=11 // pred_check_branch
          %101 = sbr.rel (%p99) target = $region16
        $region15: #{upsample_simple.1} parent=11 // pred_region
          _
        $region16: #{upsample_simple.1} parent=11 // pred_fallthru
          _
      $region12: #{upsample_simple.1} parent=5 // pred_fallthru
        _
      %p102 = scmp.lt.s32.totalorder %s11, 2
      // Predicated region
      $region17: #{upsample_simple.1} parent=5 // pred_check
        %p103 = pneg %p102
      $region18: #{upsample_simple.1} parent=5 // pred_check_branch
        %105 = sbr.rel (%p103) target = $region20
      $region19: #{upsample_simple.1} parent=5 // pred_region
        // Predicated region
        $region21: #{upsample_simple.1} parent=19 // pred_check
          %p106 = pneg %p31
        $region22: #{upsample_simple.1} parent=19 // pred_check_branch
          %108 = sbr.rel (%p106) target = $region24
        $region23: #{upsample_simple.1} parent=19 // pred_region
          %s109 = sand.u32 %s21, 1
          %s110 = scalar_lea.sflag [#allocation3], %s109
          %s111 = sand.u32 %s21, 1
          %s112 = smul.addr %s111, 64
          %s113 = scalar_lea.vmem [#allocation2], %s112
          %s114 = smul.u32 8, %s11
          %116 = vsyncadd %s110, 0
          %s117 = smul.addr %s114, 8
          %s118 = scalar_lea.hbm %s0, %s117
          %s119 = sshll.u32 %s118, 4
          %s120 = int_to_ptr.hbm [resolvable:$true] %s119
          %s121 = sshll.u32 %s113, 4
          %s122 = int_to_ptr.vmem [resolvable:$true] %s121
          %127 = dma.hbm_to_vmem [thread:$0]  %s120, 1024, %s122, %s110, 128, 128, 8
        $region24: #{upsample_simple.1} parent=19 // pred_fallthru
          _
      $region20: #{upsample_simple.1} parent=5 // pred_fallthru
        _
      %p128 = scmp.le.s32.totalorder 1, %s11
      %p129 = scmp.lt.s32.totalorder %s11, 3
      %p130 = pnand %p128, %p129
      %p131 = pneg %p130
      // Predicated region
      $region25: #{upsample_simple.1} parent=5 // pred_check
        _
      $region26: #{upsample_simple.1} parent=5 // pred_check_branch
        %133 = sbr.rel (%p130) target = $region28
      $region27: #{upsample_simple.1} parent=5 // pred_region
        %s134 = ssub.s32 %s11, 1
        %s135 = sand.u32 %s24, 1
        %s136 = scalar_lea.sflag [#allocation3], %s135
        %s137 = sand.u32 %s24, 1
        %s138 = smul.addr %s137, 64
        %s139 = scalar_lea.vmem [#allocation2], %s138
        // Predicated region
        $region29: #{upsample_simple.1} parent=27 // pred_check
          %p140 = pneg %p37
        $region30: #{upsample_simple.1} parent=27 // pred_check_branch
          %142 = sbr.rel (%p140) target = $region32
        $region31: #{upsample_simple.1} parent=27 // pred_region
          %144 = dma.done %s136, 1024
        $region32: #{upsample_simple.1} parent=27 // pred_fallthru
          _
        %s145 = sand.u32 %s24, 1
        %s146 = scalar_lea.sflag [#allocation3], %s145
        %s147 = sand.u32 %s24, 1
        %s148 = smul.addr %s147, 64
        %s149 = scalar_lea.vmem [#allocation2], %s148
        %p150 = pneg %p37
        %p151 = pneg %p34
        %p152 = pneg %p58
        %p153 = pneg %p55
        %p154 = pneg %p84
        %p155 = pneg %p81
        %s156 = smul.u32 8, %s16
        %p157 = scmp.lt.s32.totalorder %s156, 15
        %s158 = scalar_select %p157, %s156, 15
        %s159 = smul.addr %s158, 8
        %s160 = scalar_lea.vmem %s2, %s159
        %s161 = smul.u32 8, %s16
        %s162 = smul.u32 8, %s16
        %p163 = scmp.lt.s32.totalorder %s162, 15
        %s164 = scalar_select %p163, %s162, 15
        %s165 = smul.addr %s164, 8
        %s166 = scalar_lea.vmem %s2, %s165
        %s167 = smul.u32 8, %s16
        %v168 = vld [vmem:[%s139] sm:$0xff]
        %v169 = vld [vmem:[%s139 + $0x8] sm:$0xff]
        %v170 = vld [vmem:[%s139 + $0x10] sm:$0xff]
        %v171 = vld [vmem:[%s139 + $0x18] sm:$0xff]
        %v172 = vld [vmem:[%s139 + $0x20] sm:$0xff]
        %v173 = vld [vmem:[%s139 + $0x28] sm:$0xff]
        %v174 = vld [vmem:[%s139 + $0x30] sm:$0xff]
        %v175 = vld [vmem:[%s139 + $0x38] sm:$0xff]
        %v176 = vld [vmem:[%s1] sm:$0xff]
        %v177 = vld [vmem:[%s1 + $0x8] sm:$0xff]
        %vm178 = vcmask 130048
        %v180 = vsel %vm178, %v168, 0
        %v183 = vsel %vm178, %v169, 0
        %v186 = vsel %vm178, %v170, 0
        %v189 = vsel %vm178, %v171, 0
        %v192 = vsel %vm178, %v172, 0
        %v195 = vsel %vm178, %v173, 0
        %v198 = vsel %vm178, %v174, 0
        %v201 = vsel %vm178, %v175, 0
        %203 = vmatpush.msra.mxu0 0.0
        %204 = vmatpush.msra.mxu0 0.0
        %205 = vmatpush.msra.mxu0 0.0
        %206 = vmatpush.msra.mxu0 0.0
        %207 = vmatpush.msra.mxu0 0.0
        %208 = vmatpush.msra.mxu0 0.0
        %209 = vmatpush.msra.mxu0 0.0
        %210 = vmatpush.msra.mxu0 0.0
        %211 = vmatpush.msra.mxu0 0.0
        %212 = vmatpush.msra.mxu0 0.0
        %213 = vmatpush.msra.mxu0 0.0
        %214 = vmatpush.msra.mxu0 0.0
        %215 = vmatpush.msra.mxu0 0.0
        %216 = vmatpush.msra.mxu0 0.0
        %217 = vmatpush.msra.mxu0 %v177
        %218 = vmatpush.msra.mxu0 %v176
        %219 = vmatmul.f32.gmra.mxu0 %v180
        %v220 = vpop.f32.mrf.mxu0
        %v221 = vadd.f32 0.0, %v220
        %222 = vmatmul.f32.gmra.mxu0 %v183
        %v223 = vpop.f32.mrf.mxu0
        %v224 = vadd.f32 0.0, %v223
        %225 = vmatmul.f32.gmra.mxu0 %v186
        %v226 = vpop.f32.mrf.mxu0
        %v227 = vadd.f32 0.0, %v226
        %228 = vmatmul.f32.gmra.mxu0 %v189
        %v229 = vpop.f32.mrf.mxu0
        %v230 = vadd.f32 0.0, %v229
        %231 = vmatmul.f32.gmra.mxu0 %v192
        %v232 = vpop.f32.mrf.mxu0
        %v233 = vadd.f32 0.0, %v232
        %234 = vmatmul.f32.gmra.mxu0 %v195
        %v235 = vpop.f32.mrf.mxu0
        %v236 = vadd.f32 0.0, %v235
        %237 = vmatmul.f32.gmra.mxu0 %v198
        %v238 = vpop.f32.mrf.mxu0
        %v239 = vadd.f32 0.0, %v238
        %240 = vmatmul.f32.gmra.mxu0 %v201
        %v241 = vpop.f32.mrf.mxu0
        %v242 = vadd.f32 0.0, %v241
        %243 = vdwg.mxu0
        %vm244 = vcmask 523264
        %245 = vst.msk [vmem:[%s166] sm:$0xff] %vm244, %v221
        %246 = vst.msk [vmem:[%s166 + $0x8] sm:$0xff] %vm244, %v224
        %247 = vst.msk [vmem:[%s166 + $0x10] sm:$0xff] %vm244, %v227
        %248 = vst.msk [vmem:[%s166 + $0x18] sm:$0xff] %vm244, %v230
        %249 = vst.msk [vmem:[%s166 + $0x20] sm:$0xff] %vm244, %v233
        %250 = vst.msk [vmem:[%s166 + $0x28] sm:$0xff] %vm244, %v236
        %251 = vst.msk [vmem:[%s166 + $0x30] sm:$0xff] %vm244, %v239
        %252 = vst.msk [vmem:[%s166 + $0x38] sm:$0xff] %vm244, %v242
        %s253 = smul.u32 8, %s16
        %p254 = scmp.lt.s32.totalorder %s253, 15
        %s255 = scalar_select %p254, %s253, 15
        %s256 = smul.addr %s255, 8
        %s257 = scalar_lea.vmem %s2, %s256
        // Predicated region
        $region33: #{upsample_simple.1} parent=27 // pred_check
          %p258 = pneg %p81
        $region34: #{upsample_simple.1} parent=27 // pred_check_branch
          %260 = sbr.rel (%p258) target = $region36
        $region35: #{upsample_simple.1} parent=27 // pred_region
          %s261 = smul.u32 8, %s16
        $region36: #{upsample_simple.1} parent=27 // pred_fallthru
          _
      $region28: #{upsample_simple.1} parent=5 // pred_fallthru
        _
      %p262 = scmp.le.s32.totalorder 2, %s11
      // Predicated region
      $region37: #{upsample_simple.1} parent=5 // pred_check
        %p263 = pneg %p262
      $region38: #{upsample_simple.1} parent=5 // pred_check_branch
        %265 = sbr.rel (%p263) target = $region40
      $region39: #{upsample_simple.1} parent=5 // pred_region
        %s266 = ssub.s32 %s11, 2
        // Predicated region
        $region41: #{upsample_simple.1} parent=39 // pred_check
          %p267 = pneg %p87
        $region42: #{upsample_simple.1} parent=39 // pred_check_branch
          %269 = sbr.rel (%p267) target = $region44
        $region43: #{upsample_simple.1} parent=39 // pred_region
          %s270 = smul.u32 8, %s17
          %p271 = scmp.lt.s32.totalorder %s270, 15
          %s272 = scalar_select %p271, %s270, 15
          %s273 = smul.addr %s272, 8
          %s274 = scalar_lea.vmem %s2, %s273
        $region44: #{upsample_simple.1} parent=39 // pred_fallthru
          _
      $region40: #{upsample_simple.1} parent=5 // pred_fallthru
        _
    $region6: #{upsample_simple.1} parent=1 // loop_footer
      %s15 = sadd.s32 1, %s11
    $region7: #{upsample_simple.1} parent=1 // loop_footer_branch
      %10 = sbr.rel target = $region3
    $region8: #{upsample_simple.1} parent=1 // loop_exit
      _
    %275 = vsyncpa [#allocation3], 1
    %s276 = scalar_lea.sflag [#allocation3], 1
    %277 = vsyncpa %s276, 1

</llo_original>
